<compile_context>
chip_gen: v6e
topology: v6e:2x2x1
jax: 0.10.0
libtpu: 0.0.40
codegen_flags: <defaults>
</compile_context>

<pallas_src>
import functools

import jax
import jax.numpy as jnp
from jax.experimental import pallas as pl
from jax.experimental.pallas import tpu as pltpu

NUM_STATES = 4
NUM_ACTIONS = 3
H1 = 128
H2 = 16

_LANE = 128      # lane width: minimum batch-tile granularity
_MAX_TB = 4096   # cap on batch tile (keeps f32 temps well under VMEM limit)


def _mlp_kernel(x_ref, w1_ref, b1_ref, w2_ref, b2_ref, w3_ref, b3_ref, o_ref):
    # Batch-on-lanes layout: x_ref is (4, tb); every layer is W @ x so the
    # activations stay (features, tb) -> lane-dense loads, MXU feeds, stores.
    x = x_ref[...].astype(jnp.bfloat16)                       # (4, tb)

    # fc1: (128, 4) @ (4, tb) -> (128, tb).  K=4 underfills the MXU but the
    # MXU is idle otherwise; this removes the VALU/XLU lane-broadcast work.
    h1 = jnp.dot(w1_ref[...], x,
                 preferred_element_type=jnp.float32) + b1_ref[...]
    h1 = jnp.maximum(h1, 0.0)                                  # (128, tb) f32

    # fc2: (16, 128) @ (128, tb) -> (16, tb)
    h2 = jnp.dot(w2_ref[...], h1.astype(jnp.bfloat16),
                 preferred_element_type=jnp.float32) + b2_ref[...]
    h2 = jnp.maximum(h2, 0.0)                                  # (16, tb) f32

    # out: (3, 16) @ (16, tb) -> (3, tb)
    out = jnp.dot(w3_ref[...], h2.astype(jnp.bfloat16),
                  preferred_element_type=jnp.float32) + b3_ref[...]

    o_ref[...] = out.astype(o_ref.dtype)                       # lane-dense store


def _pick_tb(batch):
    """Lane-aligned batch tile.

    Small batches: one 128/256-wide block (no padding waste).  Large batches:
    big tiles (multiple of 256, capped at 4096) to amortize ~0.35us/step grid
    overhead, while keeping >= 2 grid steps so v7x's two TCs can both work.
    """
    b = pl.cdiv(batch, _LANE) * _LANE
    if b <= 2 * _LANE:
        return int(b)
    tb = pl.cdiv(b // 2, 2 * _LANE) * (2 * _LANE)   # ~half the batch, mult of 256
    return int(min(_MAX_TB, max(2 * _LANE, tb)))


@functools.partial(jax.jit, static_argnames=("tb",))
def net_forward(x, params, *, tb=None):
    """x: [B, NUM_STATES] f32 -> actions_value: [B, NUM_ACTIONS] f32."""
    w1, b1, w2, b2, w3, b3 = params
    B = x.shape[0]
    if tb is None:
        tb = _pick_tb(B)

    nb = pl.cdiv(B, tb)
    Bp = nb * tb

    # One cheap wrapper transpose in, one out: the kernel itself works on the
    # batch-on-lanes layout (features on sublanes, batch on lanes).
    xt = x.T                                      # (4, B)
    if Bp != B:
        xt = jnp.pad(xt, ((0, 0), (0, Bp - B)))   # (4, Bp)

    weight_bytes = sum(int(a.size) * a.dtype.itemsize
                       for a in (w1, b1, w2, b2, w3, b3))
    cost = pl.CostEstimate(
        flops=2 * Bp * (NUM_STATES * H1 + H1 * H2 + H2 * NUM_ACTIONS),
        transcendentals=0,
        bytes_accessed=Bp * (NUM_STATES + NUM_ACTIONS) * 4 + weight_bytes,
    )

    const = lambda a: pl.BlockSpec(a.shape, lambda i: (0,) * a.ndim)

    out_t = pl.pallas_call(
        _mlp_kernel,
        out_shape=jax.ShapeDtypeStruct((NUM_ACTIONS, Bp), jnp.float32),
        grid=(nb,),
        in_specs=[
            pl.BlockSpec((NUM_STATES, tb), lambda i: (0, i)),  # x: streamed
            const(w1), const(b1),                              # weights: resident
            const(w2), const(b2),
            const(w3), const(b3),
        ],
        out_specs=pl.BlockSpec((NUM_ACTIONS, tb), lambda i: (0, i)),
        compiler_params=pltpu.CompilerParams(
            dimension_semantics=("parallel",),
            vmem_limit_bytes=32 * 1024 * 1024,
        ),
        cost_estimate=cost,
    )(xt, w1, b1, w2, b2, w3, b3)

    return out_t[:, :B].T                          # (B, NUM_ACTIONS)


def init_params(key):
    """Deterministic synthetic init mirroring Net.__init__ shapes.

    Weights are kept in PyTorch [out, in] order (so the kernel does W @ x);
    biases are [out, 1].  Weights ~ Normal(0, 0.1) as in the module; biases
    ~ U(-1/sqrt(fan_in), +1/sqrt(fan_in)) like nn.Linear's default.
    """
    ks = jax.random.split(key, 6)

    def linear(kw, kb, fan_in, fan_out):
        w = 0.1 * jax.random.normal(kw, (fan_out, fan_in), dtype=jnp.float32)
        bound = 1.0 / jnp.sqrt(jnp.float32(fan_in))
        b = jax.random.uniform(kb, (fan_out, 1), dtype=jnp.float32,
                               minval=-bound, maxval=bound)
        return w, b

    w1, b1 = linear(ks[0], ks[1], NUM_STATES, H1)
    w2, b2 = linear(ks[2], ks[3], H1, H2)
    w3, b3 = linear(ks[4], ks[5], H2, NUM_ACTIONS)
    return (w1, b1, w2, b2, w3, b3)


def quantize_params(params):
    """bf16 weights (MXU-native, half DMA bytes), f32 biases."""
    w1, b1, w2, b2, w3, b3 = params
    return (w1.astype(jnp.bfloat16), b1,
            w2.astype(jnp.bfloat16), b2,
            w3.astype(jnp.bfloat16), b3)


def _reference(x, params):
    """Pure-JAX reference using the same (bf16) weights upcast to f32."""
    w1, b1, w2, b2, w3, b3 = params
    w1, w2, w3 = (w.astype(jnp.float32) for w in (w1, w2, w3))
    h1 = jnp.maximum(x @ w1.T + b1.T, 0.0)
    h2 = jnp.maximum(h1 @ w2.T + b2.T, 0.0)
    return h2 @ w3.T + b3.T


if __name__ == "__main__":
    key = jax.random.PRNGKey(0)
    k_params, k_x, k_x2 = jax.random.split(key, 3)
    params = quantize_params(init_params(k_params))

    # Batched forward (DQN replay minibatch): picks tb=256 -> 2 grid steps.
    B = 512
    x = jax.random.normal(k_x, (B, NUM_STATES), dtype=jnp.float32)
    actions_value = net_forward(x, params)
    jax.block_until_ready(actions_value)

    ref = _reference(x, params)
    assert actions_value.shape == (B, NUM_ACTIONS)
    # bf16 activations/MXU rounding inside the kernel -> loose-ish tolerance.
    assert jnp.allclose(actions_value, ref, atol=2e-2, rtol=2e-2)

    # Small ragged batch (exercises the padding path, tb shrinks to 128).
    B2 = 10
    x2 = jax.random.normal(k_x2, (B2, NUM_STATES), dtype=jnp.float32)
    av2 = net_forward(x2, params)
    jax.block_until_ready(av2)
    assert av2.shape == (B2, NUM_ACTIONS)
    assert jnp.allclose(av2, _reference(x2, params), atol=2e-2, rtol=2e-2)

    print("KERNEL_OK")
</pallas_src>

<mosaic_0001>
module attributes {stable_mosaic.version = 11 : i64} {
  func.func @_mlp_kernel(%arg0: i32, %arg1: memref<4x256xf32, #tpu.memory_space<vmem>>, %arg2: memref<128x4xbf16, #tpu.memory_space<vmem>>, %arg3: memref<128x1xf32, #tpu.memory_space<vmem>>, %arg4: memref<16x128xbf16, #tpu.memory_space<vmem>>, %arg5: memref<16x1xf32, #tpu.memory_space<vmem>>, %arg6: memref<3x16xbf16, #tpu.memory_space<vmem>>, %arg7: memref<3x1xf32, #tpu.memory_space<vmem>>, %arg8: memref<3x256xf32, #tpu.memory_space<vmem>>) attributes {dimension_semantics = [#tpu.dimension_semantics<parallel>], iteration_bounds = array<i64: 2>, scalar_prefetch = 0 : i64, scratch_operands = 0 : i64, tpu.core_type = #tpu.core_type<tc>, window_params = [{transform_indices = @transform_0, window_bounds = array<i64: 4, 256>}, {pipeline_mode = #tpu.pipeline_mode<synchronous>, transform_indices = @transform_1, window_bounds = array<i64: 128, 4>}, {pipeline_mode = #tpu.pipeline_mode<synchronous>, transform_indices = @transform_2, window_bounds = array<i64: 128, 1>}, {pipeline_mode = #tpu.pipeline_mode<synchronous>, transform_indices = @transform_3, window_bounds = array<i64: 16, 128>}, {pipeline_mode = #tpu.pipeline_mode<synchronous>, transform_indices = @transform_4, window_bounds = array<i64: 16, 1>}, {pipeline_mode = #tpu.pipeline_mode<synchronous>, transform_indices = @transform_5, window_bounds = array<i64: 3, 16>}, {pipeline_mode = #tpu.pipeline_mode<synchronous>, transform_indices = @transform_6, window_bounds = array<i64: 3, 1>}, {transform_indices = @transform_7, window_bounds = array<i64: 3, 256>}]} {
    %c0 = arith.constant 0 : index
    %c0_0 = arith.constant 0 : index
    %0 = vector.load %arg1[%c0, %c0_0] : memref<4x256xf32, #tpu.memory_space<vmem>>, vector<4x256xf32>
    %1 = arith.truncf %0 : vector<4x256xf32> to vector<4x256xbf16>
    %c0_1 = arith.constant 0 : index
    %c0_2 = arith.constant 0 : index
    %2 = vector.load %arg2[%c0_1, %c0_2] : memref<128x4xbf16, #tpu.memory_space<vmem>>, vector<128x4xbf16>
    %cst = arith.constant dense<0.000000e+00> : vector<128x256xf32>
    %3 = tpu.matmul %2, %1, %cst {dimension_numbers = #tpu.dot_dimension_numbers<[1], [0], [0], [1], [0, 0, 1, 1], [], []>} : vector<128x4xbf16>, vector<4x256xbf16>, vector<128x256xf32> -> vector<128x256xf32>
    %c0_3 = arith.constant 0 : index
    %c0_4 = arith.constant 0 : index
    %4 = vector.load %arg3[%c0_3, %c0_4] : memref<128x1xf32, #tpu.memory_space<vmem>>, vector<128x1xf32>
    %5 = vector.broadcast %4 : vector<128x1xf32> to vector<128x256xf32>
    %6 = arith.addf %3, %5 : vector<128x256xf32>
    %cst_5 = arith.constant 0.000000e+00 : f32
    %7 = vector.broadcast %cst_5 : f32 to vector<128x256xf32>
    %8 = arith.maximumf %6, %7 : vector<128x256xf32>
    %c0_6 = arith.constant 0 : index
    %c0_7 = arith.constant 0 : index
    %9 = vector.load %arg4[%c0_6, %c0_7] : memref<16x128xbf16, #tpu.memory_space<vmem>>, vector<16x128xbf16>
    %10 = arith.truncf %8 : vector<128x256xf32> to vector<128x256xbf16>
    %cst_8 = arith.constant dense<0.000000e+00> : vector<16x256xf32>
    %11 = tpu.matmul %9, %10, %cst_8 {dimension_numbers = #tpu.dot_dimension_numbers<[1], [0], [0], [1], [0, 0, 1, 1], [], []>} : vector<16x128xbf16>, vector<128x256xbf16>, vector<16x256xf32> -> vector<16x256xf32>
    %c0_9 = arith.constant 0 : index
    %c0_10 = arith.constant 0 : index
    %12 = vector.load %arg5[%c0_9, %c0_10] : memref<16x1xf32, #tpu.memory_space<vmem>>, vector<16x1xf32>
    %13 = vector.broadcast %12 : vector<16x1xf32> to vector<16x256xf32>
    %14 = arith.addf %11, %13 : vector<16x256xf32>
    %cst_11 = arith.constant 0.000000e+00 : f32
    %15 = vector.broadcast %cst_11 : f32 to vector<16x256xf32>
    %16 = arith.maximumf %14, %15 : vector<16x256xf32>
    %c0_12 = arith.constant 0 : index
    %c0_13 = arith.constant 0 : index
    %17 = vector.load %arg6[%c0_12, %c0_13] : memref<3x16xbf16, #tpu.memory_space<vmem>>, vector<3x16xbf16>
    %18 = arith.truncf %16 : vector<16x256xf32> to vector<16x256xbf16>
    %cst_14 = arith.constant dense<0.000000e+00> : vector<3x256xf32>
    %19 = tpu.matmul %17, %18, %cst_14 {dimension_numbers = #tpu.dot_dimension_numbers<[1], [0], [0], [1], [0, 0, 1, 1], [], []>} : vector<3x16xbf16>, vector<16x256xbf16>, vector<3x256xf32> -> vector<3x256xf32>
    %c0_15 = arith.constant 0 : index
    %c0_16 = arith.constant 0 : index
    %20 = vector.load %arg7[%c0_15, %c0_16] : memref<3x1xf32, #tpu.memory_space<vmem>>, vector<3x1xf32>
    %21 = vector.broadcast %20 : vector<3x1xf32> to vector<3x256xf32>
    %22 = arith.addf %19, %21 : vector<3x256xf32>
    %c0_17 = arith.constant 0 : index
    %c0_18 = arith.constant 0 : index
    %23 = vector.load %arg8[%c0_17, %c0_18] : memref<3x256xf32, #tpu.memory_space<vmem>>, vector<3x256xf32>
    tpu.vector_store %arg8[%c0_17, %c0_18], %22 {strides = array<i32>} : memref<3x256xf32, #tpu.memory_space<vmem>>, vector<3x256xf32>,
    return
  }
  func.func @transform_0(%arg0: i32) -> (i32, i32) {
    %c0_i32 = arith.constant 0 : i32
    %c0_i32_0 = arith.constant 0 : i32
    return %c0_i32, %arg0 : i32, i32
  }
  func.func @transform_1(%arg0: i32) -> (i32, i32) {
    %c0_i32 = arith.constant 0 : i32
    %c0_i32_0 = arith.constant 0 : i32
    %c0_i32_1 = arith.constant 0 : i32
    return %c0_i32, %c0_i32_0 : i32, i32
  }
  func.func @transform_2(%arg0: i32) -> (i32, i32) {
    %c0_i32 = arith.constant 0 : i32
    %c0_i32_0 = arith.constant 0 : i32
    %c0_i32_1 = arith.constant 0 : i32
    return %c0_i32, %c0_i32_0 : i32, i32
  }
  func.func @transform_3(%arg0: i32) -> (i32, i32) {
    %c0_i32 = arith.constant 0 : i32
    %c0_i32_0 = arith.constant 0 : i32
    %c0_i32_1 = arith.constant 0 : i32
    return %c0_i32, %c0_i32_0 : i32, i32
  }
  func.func @transform_4(%arg0: i32) -> (i32, i32) {
    %c0_i32 = arith.constant 0 : i32
    %c0_i32_0 = arith.constant 0 : i32
    %c0_i32_1 = arith.constant 0 : i32
    return %c0_i32, %c0_i32_0 : i32, i32
  }
  func.func @transform_5(%arg0: i32) -> (i32, i32) {
    %c0_i32 = arith.constant 0 : i32
    %c0_i32_0 = arith.constant 0 : i32
    %c0_i32_1 = arith.constant 0 : i32
    return %c0_i32, %c0_i32_0 : i32, i32
  }
  func.func @transform_6(%arg0: i32) -> (i32, i32) {
    %c0_i32 = arith.constant 0 : i32
    %c0_i32_0 = arith.constant 0 : i32
    %c0_i32_1 = arith.constant 0 : i32
    return %c0_i32, %c0_i32_0 : i32, i32
  }
  func.func @transform_7(%arg0: i32) -> (i32, i32) {
    %c0_i32 = arith.constant 0 : i32
    %c0_i32_0 = arith.constant 0 : i32
    return %c0_i32, %arg0 : i32, i32
  }
}

</mosaic_0001>

<llo_original>
// kernel: net_forward.1
$region0: #{net_forward.1}
  #allocation0 [shape = 'u32[]', space=smem, size = 0x4, offset = 0x4, fixed_abs, tag = 'smem constant byte address 0x4 - core index']
  #allocation1 [shape = 'u32[144,128]{1,0:T(1,128)}', space=vmem, size = 0x12000, scoped, tag = 'internal scratch']
  %s0 = inlined_call_operand.vmem [shape: f32[4,512], index: 0, kind: input, shape index: {}]
  %s1 = inlined_call_operand.vmem [shape: bf16[128,4], index: 1, kind: input, shape index: {}]
  %s2 = inlined_call_operand.vmem [shape: f32[128,1], index: 2, kind: input, shape index: {}]
  %s3 = inlined_call_operand.vmem [shape: bf16[16,128], index: 3, kind: input, shape index: {}]
  %s4 = inlined_call_operand.vmem [shape: f32[16,1], index: 4, kind: input, shape index: {}]
  %s5 = inlined_call_operand.vmem [shape: bf16[3,16], index: 5, kind: input, shape index: {}]
  %s6 = inlined_call_operand.vmem [shape: f32[3,1], index: 6, kind: input, shape index: {}]
  %s7 = inlined_call_operand.hbm [shape: f32[3,512], index: 7, kind: output, shape index: {}]
  %s8 = sld [smem:[#allocation0]]
  $region61: #{net_forward.1} parent=0
    _
  %s10 = ssub.s32 1, %s8
  %s11 = scalar_select 0, %s10, %s8
  $region1: #{net_forward.1} parent=0
    #allocation2 [shape = 'u8[8192]{0}', space=vmem, size = 0x2000, scoped, tag = 'output window, operand 0']
    #allocation3 [shape = 's32[2]{0}', space=sflag, size = 0x8, scoped, tag = 'scoped memory for net_forward.1']
    %12 = vsyncpa [#allocation3], 0
    %s13 = scalar_lea.sflag [#allocation3], 1
    %14 = vsyncpa %s13, 0
    loop: start=0, step=1, limit=4
    $region2: #{net_forward.1} parent=1 // loop_pre_header
      _
    $region3: #{net_forward.1} parent=1 // loop_header
      %s16 = sphi 0, %s20
      %p17 = scmp.ge.s32.totalorder %s16, 4
      %s26 = sphi 0, %s28
      %s29 = sphi 0, %s26
      %s30 = sphi 0, %s29
      %s46 = sphi 0, %s30
      %s50 = sphi 0, %s50
      %s52 = sphi 0, %s50
      %s53 = sphi 0, %s52
      %s67 = sphi 0, %s53
      %s71 = sphi 0, %s71
      %s73 = sphi 0, %s71
      %s74 = sphi 0, %s73
      %s88 = sphi 0, %s74
      %s92 = sphi 0, %s92
      %s94 = sphi 0, %s92
      %s95 = sphi 0, %s94
      %s109 = sphi 0, %s95
      %s113 = sphi 0, %s113
      %s115 = sphi 0, %s113
      %s116 = sphi 0, %s115
      %s130 = sphi 0, %s116
      %s134 = sphi 0, %s134
      %s136 = sphi 0, %s134
      %s137 = sphi 0, %s136
      %s151 = sphi 0, %s137
      %s155 = sphi 0, %s155
      %s157 = sphi 0, %s155
      %s158 = sphi 0, %s157
      %s172 = sphi 0, %s158
      %s178 = sphi 0, %s180
      %s181 = sphi 0, %s178
      %s182 = sphi 0, %s181
      %s198 = sphi 0, %s182
    $region4: #{net_forward.1} parent=1 // loop_header_branch
      %19 = sbr.rel (%p17) target = $region8
    $region5: #{net_forward.1} parent=1 // loop_body
      %s21 = ssub.s32 %s16, 1
      %s22 = ssub.s32 %s16, 2
      %s23 = sadd.s32 %s16, 1
      %s24 = ssub.s32 %s16, %s23
      %p25 = scmp.eq.s32.totalorder %s24, 0
      %s27 = sadd.s32 %s26, 1
      %s28 = scalar_select %p25, %s26, %s27
      %p31 = pneg %p25
      %p32 = scmp.eq.s32.totalorder %s16, 1
      %p33 = por %p31, %p32
      %p34 = scmp.ne.s32.totalorder %s26, %s29
      %p35 = scmp.eq.s32.totalorder %s16, 0
      %p36 = por %p34, %p35
      %p37 = scmp.ne.s32.totalorder %s26, %s29
      %p38 = scmp.eq.s32.totalorder %s21, 1
      %p39 = por %p37, %p38
      %p40 = scmp.ne.s32.totalorder %s29, %s30
      %p41 = scmp.eq.s32.totalorder %s21, 0
      %p42 = por %p40, %p41
      %p43 = scmp.ne.s32.totalorder %s29, %s30
      %p44 = scmp.eq.s32.totalorder %s22, 1
      %p45 = por %p43, %p44
      %p47 = scmp.ne.s32.totalorder %s30, %s46
      %p48 = scmp.eq.s32.totalorder %s22, 0
      %p49 = por %p47, %p48
      %s51 = sadd.s32 %s50, 1
      %p54 = scmp.eq.s32.totalorder %s16, 1
      %p55 = scmp.ne.s32.totalorder %s50, %s52
      %p56 = scmp.eq.s32.totalorder %s16, 0
      %p57 = por %p55, %p56
      %p58 = scmp.ne.s32.totalorder %s50, %s52
      %p59 = scmp.eq.s32.totalorder %s21, 1
      %p60 = por %p58, %p59
      %p61 = scmp.ne.s32.totalorder %s52, %s53
      %p62 = scmp.eq.s32.totalorder %s21, 0
      %p63 = por %p61, %p62
      %p64 = scmp.ne.s32.totalorder %s52, %s53
      %p65 = scmp.eq.s32.totalorder %s22, 1
      %p66 = por %p64, %p65
      %p68 = scmp.ne.s32.totalorder %s53, %s67
      %p69 = scmp.eq.s32.totalorder %s22, 0
      %p70 = por %p68, %p69
      %s72 = sadd.s32 %s71, 1
      %p75 = scmp.eq.s32.totalorder %s16, 1
      %p76 = scmp.ne.s32.totalorder %s71, %s73
      %p77 = scmp.eq.s32.totalorder %s16, 0
      %p78 = por %p76, %p77
      %p79 = scmp.ne.s32.totalorder %s71, %s73
      %p80 = scmp.eq.s32.totalorder %s21, 1
      %p81 = por %p79, %p80
      %p82 = scmp.ne.s32.totalorder %s73, %s74
      %p83 = scmp.eq.s32.totalorder %s21, 0
      %p84 = por %p82, %p83
      %p85 = scmp.ne.s32.totalorder %s73, %s74
      %p86 = scmp.eq.s32.totalorder %s22, 1
      %p87 = por %p85, %p86
      %p89 = scmp.ne.s32.totalorder %s74, %s88
      %p90 = scmp.eq.s32.totalorder %s22, 0
      %p91 = por %p89, %p90
      %s93 = sadd.s32 %s92, 1
      %p96 = scmp.eq.s32.totalorder %s16, 1
      %p97 = scmp.ne.s32.totalorder %s92, %s94
      %p98 = scmp.eq.s32.totalorder %s16, 0
      %p99 = por %p97, %p98
      %p100 = scmp.ne.s32.totalorder %s92, %s94
      %p101 = scmp.eq.s32.totalorder %s21, 1
      %p102 = por %p100, %p101
      %p103 = scmp.ne.s32.totalorder %s94, %s95
      %p104 = scmp.eq.s32.totalorder %s21, 0
      %p105 = por %p103, %p104
      %p106 = scmp.ne.s32.totalorder %s94, %s95
      %p107 = scmp.eq.s32.totalorder %s22, 1
      %p108 = por %p106, %p107
      %p110 = scmp.ne.s32.totalorder %s95, %s109
      %p111 = scmp.eq.s32.totalorder %s22, 0
      %p112 = por %p110, %p111
      %s114 = sadd.s32 %s113, 1
      %p117 = scmp.eq.s32.totalorder %s16, 1
      %p118 = scmp.ne.s32.totalorder %s113, %s115
      %p119 = scmp.eq.s32.totalorder %s16, 0
      %p120 = por %p118, %p119
      %p121 = scmp.ne.s32.totalorder %s113, %s115
      %p122 = scmp.eq.s32.totalorder %s21, 1
      %p123 = por %p121, %p122
      %p124 = scmp.ne.s32.totalorder %s115, %s116
      %p125 = scmp.eq.s32.totalorder %s21, 0
      %p126 = por %p124, %p125
      %p127 = scmp.ne.s32.totalorder %s115, %s116
      %p128 = scmp.eq.s32.totalorder %s22, 1
      %p129 = por %p127, %p128
      %p131 = scmp.ne.s32.totalorder %s116, %s130
      %p132 = scmp.eq.s32.totalorder %s22, 0
      %p133 = por %p131, %p132
      %s135 = sadd.s32 %s134, 1
      %p138 = scmp.eq.s32.totalorder %s16, 1
      %p139 = scmp.ne.s32.totalorder %s134, %s136
      %p140 = scmp.eq.s32.totalorder %s16, 0
      %p141 = por %p139, %p140
      %p142 = scmp.ne.s32.totalorder %s134, %s136
      %p143 = scmp.eq.s32.totalorder %s21, 1
      %p144 = por %p142, %p143
      %p145 = scmp.ne.s32.totalorder %s136, %s137
      %p146 = scmp.eq.s32.totalorder %s21, 0
      %p147 = por %p145, %p146
      %p148 = scmp.ne.s32.totalorder %s136, %s137
      %p149 = scmp.eq.s32.totalorder %s22, 1
      %p150 = por %p148, %p149
      %p152 = scmp.ne.s32.totalorder %s137, %s151
      %p153 = scmp.eq.s32.totalorder %s22, 0
      %p154 = por %p152, %p153
      %s156 = sadd.s32 %s155, 1
      %p159 = scmp.eq.s32.totalorder %s16, 1
      %p160 = scmp.ne.s32.totalorder %s155, %s157
      %p161 = scmp.eq.s32.totalorder %s16, 0
      %p162 = por %p160, %p161
      %p163 = scmp.ne.s32.totalorder %s155, %s157
      %p164 = scmp.eq.s32.totalorder %s21, 1
      %p165 = por %p163, %p164
      %p166 = scmp.ne.s32.totalorder %s157, %s158
      %p167 = scmp.eq.s32.totalorder %s21, 0
      %p168 = por %p166, %p167
      %p169 = scmp.ne.s32.totalorder %s157, %s158
      %p170 = scmp.eq.s32.totalorder %s22, 1
      %p171 = por %p169, %p170
      %p173 = scmp.ne.s32.totalorder %s158, %s172
      %p174 = scmp.eq.s32.totalorder %s22, 0
      %p175 = por %p173, %p174
      %s176 = ssub.s32 %s16, %s23
      %p177 = scmp.eq.s32.totalorder %s176, 0
      %s179 = sadd.s32 %s178, 1
      %s180 = scalar_select %p177, %s178, %s179
      %p183 = pneg %p177
      %p184 = scmp.eq.s32.totalorder %s16, 1
      %p185 = por %p183, %p184
      %p186 = scmp.ne.s32.totalorder %s178, %s181
      %p187 = scmp.eq.s32.totalorder %s16, 0
      %p188 = por %p186, %p187
      %p189 = scmp.ne.s32.totalorder %s178, %s181
      %p190 = scmp.eq.s32.totalorder %s21, 1
      %p191 = por %p189, %p190
      %p192 = scmp.ne.s32.totalorder %s181, %s182
      %p193 = scmp.eq.s32.totalorder %s21, 0
      %p194 = por %p192, %p193
      %p195 = scmp.ne.s32.totalorder %s181, %s182
      %p196 = scmp.eq.s32.totalorder %s22, 1
      %p197 = por %p195, %p196
      %p199 = scmp.ne.s32.totalorder %s182, %s198
      %p200 = scmp.eq.s32.totalorder %s22, 0
      %p201 = por %p199, %p200
      %p202 = scmp.le.s32.totalorder 1, %s16
      %p203 = scmp.lt.s32.totalorder %s16, 3
      %p204 = pnand %p202, %p203
      %p205 = pneg %p204
      // Predicated region
      $region9: #{net_forward.1} parent=5 // pred_check
        _
      $region10: #{net_forward.1} parent=5 // pred_check_branch
        %207 = sbr.rel (%p204) target = $region12
      $region11: #{net_forward.1} parent=5 // pred_region
        %s208 = ssub.s32 %s16, 1
        // Predicated region
        $region13: #{net_forward.1} parent=11 // pred_check
          %p209 = pneg %p63
        $region14: #{net_forward.1} parent=11 // pred_check_branch
          %211 = sbr.rel (%p209) target = $region16
        $region15: #{net_forward.1} parent=11 // pred_region
          _
        $region16: #{net_forward.1} parent=11 // pred_fallthru
          _
        // Predicated region
        $region17: #{net_forward.1} parent=11 // pred_check
          %p212 = pneg %p84
        $region18: #{net_forward.1} parent=11 // pred_check_branch
          %214 = sbr.rel (%p212) target = $region20
        $region19: #{net_forward.1} parent=11 // pred_region
          _
        $region20: #{net_forward.1} parent=11 // pred_fallthru
          _
        // Predicated region
        $region21: #{net_forward.1} parent=11 // pred_check
          %p215 = pneg %p105
        $region22: #{net_forward.1} parent=11 // pred_check_branch
          %217 = sbr.rel (%p215) target = $region24
        $region23: #{net_forward.1} parent=11 // pred_region
          _
        $region24: #{net_forward.1} parent=11 // pred_fallthru
          _
        // Predicated region
        $region25: #{net_forward.1} parent=11 // pred_check
          %p218 = pneg %p126
        $region26: #{net_forward.1} parent=11 // pred_check_branch
          %220 = sbr.rel (%p218) target = $region28
        $region27: #{net_forward.1} parent=11 // pred_region
          _
        $region28: #{net_forward.1} parent=11 // pred_fallthru
          _
        // Predicated region
        $region29: #{net_forward.1} parent=11 // pred_check
          %p221 = pneg %p147
        $region30: #{net_forward.1} parent=11 // pred_check_branch
          %223 = sbr.rel (%p221) target = $region32
        $region31: #{net_forward.1} parent=11 // pred_region
          _
        $region32: #{net_forward.1} parent=11 // pred_fallthru
          _
        // Predicated region
        $region33: #{net_forward.1} parent=11 // pred_check
          %p224 = pneg %p168
        $region34: #{net_forward.1} parent=11 // pred_check_branch
          %226 = sbr.rel (%p224) target = $region36
        $region35: #{net_forward.1} parent=11 // pred_region
          _
        $region36: #{net_forward.1} parent=11 // pred_fallthru
          _
      $region12: #{net_forward.1} parent=5 // pred_fallthru
        _
      %p227 = scmp.lt.s32.totalorder %s16, 2
      // Predicated region
      $region37: #{net_forward.1} parent=5 // pred_check
        %p228 = pneg %p227
      $region38: #{net_forward.1} parent=5 // pred_check_branch
        %230 = sbr.rel (%p228) target = $region40
      $region39: #{net_forward.1} parent=5 // pred_region
        // Predicated region
        $region41: #{net_forward.1} parent=39 // pred_check
          %p231 = pneg %p36
        $region42: #{net_forward.1} parent=39 // pred_check_branch
          %233 = sbr.rel (%p231) target = $region44
        $region43: #{net_forward.1} parent=39 // pred_region
          %s234 = smul.u32 2, %s16
          %p235 = scmp.lt.s32.totalorder %s234, 3
          %s236 = scalar_select %p235, %s234, 3
          %s237 = smul.addr %s236, 4
          %s238 = scalar_lea.vmem %s0, %s237
          %s239 = smul.u32 2, %s16
        $region44: #{net_forward.1} parent=39 // pred_fallthru
          _
      $region40: #{net_forward.1} parent=5 // pred_fallthru
        _
      %p240 = scmp.le.s32.totalorder 1, %s16
      %p241 = scmp.lt.s32.totalorder %s16, 3
      %p242 = pnand %p240, %p241
      %p243 = pneg %p242
      // Predicated region
      $region45: #{net_forward.1} parent=5 // pred_check
        _
      $region46: #{net_forward.1} parent=5 // pred_check_branch
        %245 = sbr.rel (%p242) target = $region48
      $region47: #{net_forward.1} parent=5 // pred_region
        %s246 = ssub.s32 %s16, 1
        %s247 = smul.u32 2, %s21
        %p248 = scmp.lt.s32.totalorder %s247, 3
        %s249 = scalar_select %p248, %s247, 3
        %s250 = smul.addr %s249, 4
        %s251 = scalar_lea.vmem %s0, %s250
        %p252 = pneg %p42
        %p253 = pneg %p39
        %p254 = pneg %p63
        %p255 = pneg %p60
        %p256 = pneg %p84
        %p257 = pneg %p81
        %p258 = pneg %p105
        %p259 = pneg %p102
        %p260 = pneg %p126
        %p261 = pneg %p123
        %p262 = pneg %p147
        %p263 = pneg %p144
        %p264 = pneg %p168
        %p265 = pneg %p165
        %p266 = pneg %p194
        %p267 = pneg %p191
        %s268 = sand.u32 %s181, 1
        %s269 = scalar_lea.sflag [#allocation3], %s268
        %s270 = sand.u32 %s181, 1
        %s271 = smul.addr %s270, 8
        %s272 = scalar_lea.vmem [#allocation2], %s271
        %s273 = smul.u32 2, %s21
        %p274 = scmp.lt.s32.totalorder %s273, 3
        %s275 = scalar_select %p274, %s273, 3
        %s276 = smul.addr %s275, 4
        %s277 = scalar_lea.vmem %s0, %s276
        %s278 = smul.u32 2, %s21
        %s279 = smul.u32 2, %s21
        %v281 = vld [vmem:[%s277] sm:$0xff]
        %v283 = vcombine.high %v281, %v281
        %v285 = vpack.c.bf16 %v281, %v281
        %v286 = vpack.c.bf16 %v283, %v283
        %v287 = vld [vmem:[%s1] sm:$0xf]
        %v288 = vld [vmem:[%s1 + $0x4] sm:$0xf]
        %v289 = vld [vmem:[%s1 + $0x8] sm:$0xf]
        %v290 = vld [vmem:[%s1 + $0xc] sm:$0xf]
        %v291 = vld [vmem:[%s1 + $0x10] sm:$0xf]
        %v292 = vld [vmem:[%s1 + $0x14] sm:$0xf]
        %v293 = vld [vmem:[%s1 + $0x18] sm:$0xf]
        %v294 = vld [vmem:[%s1 + $0x1c] sm:$0xf]
        %v295 = vld [vmem:[%s1 + $0x20] sm:$0xf]
        %v296 = vld [vmem:[%s1 + $0x24] sm:$0xf]
        %v297 = vld [vmem:[%s1 + $0x28] sm:$0xf]
        %v298 = vld [vmem:[%s1 + $0x2c] sm:$0xf]
        %v299 = vld [vmem:[%s1 + $0x30] sm:$0xf]
        %v300 = vld [vmem:[%s1 + $0x34] sm:$0xf]
        %v301 = vld [vmem:[%s1 + $0x38] sm:$0xf]
        %v302 = vld [vmem:[%s1 + $0x3c] sm:$0xf]
        %v303 = vld [vmem:[%s2] sm:$0xff]
        %v304 = vld [vmem:[%s2 + $0x8] sm:$0xff]
        %v305 = vld [vmem:[%s2 + $0x10] sm:$0xff]
        %v306 = vld [vmem:[%s2 + $0x18] sm:$0xff]
        %v307 = vld [vmem:[%s2 + $0x20] sm:$0xff]
        %v308 = vld [vmem:[%s2 + $0x28] sm:$0xff]
        %v309 = vld [vmem:[%s2 + $0x30] sm:$0xff]
        %v310 = vld [vmem:[%s2 + $0x38] sm:$0xff]
        %v311 = vld [vmem:[%s2 + $0x40] sm:$0xff]
        %v312 = vld [vmem:[%s2 + $0x48] sm:$0xff]
        %v313 = vld [vmem:[%s2 + $0x50] sm:$0xff]
        %v314 = vld [vmem:[%s2 + $0x58] sm:$0xff]
        %v315 = vld [vmem:[%s2 + $0x60] sm:$0xff]
        %v316 = vld [vmem:[%s2 + $0x68] sm:$0xff]
        %v317 = vld [vmem:[%s2 + $0x70] sm:$0xff]
        %v318 = vld [vmem:[%s2 + $0x78] sm:$0xff]
        %320 = vset.pattern.permute.xlu0 0
        %321 = vperm.xlu0 %320, %v303
        %v322 = vpop.permute.xlu0 %321
        %325 = vset.pattern.permute.xlu0 0
        %326 = vperm.xlu0 %325, %v304
        %v327 = vpop.permute.xlu0 %326
        %330 = vset.pattern.permute.xlu0 0
        %331 = vperm.xlu0 %330, %v305
        %v332 = vpop.permute.xlu0 %331
        %335 = vset.pattern.permute.xlu0 0
        %336 = vperm.xlu0 %335, %v306
        %v337 = vpop.permute.xlu0 %336
        %340 = vset.pattern.permute.xlu0 0
        %341 = vperm.xlu0 %340, %v307
        %v342 = vpop.permute.xlu0 %341
        %345 = vset.pattern.permute.xlu0 0
        %346 = vperm.xlu0 %345, %v308
        %v347 = vpop.permute.xlu0 %346
        %350 = vset.pattern.permute.xlu0 0
        %351 = vperm.xlu0 %350, %v309
        %v352 = vpop.permute.xlu0 %351
        %355 = vset.pattern.permute.xlu0 0
        %356 = vperm.xlu0 %355, %v310
        %v357 = vpop.permute.xlu0 %356
        %360 = vset.pattern.permute.xlu0 0
        %361 = vperm.xlu0 %360, %v311
        %v362 = vpop.permute.xlu0 %361
        %365 = vset.pattern.permute.xlu0 0
        %366 = vperm.xlu0 %365, %v312
        %v367 = vpop.permute.xlu0 %366
        %370 = vset.pattern.permute.xlu0 0
        %371 = vperm.xlu0 %370, %v313
        %v372 = vpop.permute.xlu0 %371
        %375 = vset.pattern.permute.xlu0 0
        %376 = vperm.xlu0 %375, %v314
        %v377 = vpop.permute.xlu0 %376
        %380 = vset.pattern.permute.xlu0 0
        %381 = vperm.xlu0 %380, %v315
        %v382 = vpop.permute.xlu0 %381
        %385 = vset.pattern.permute.xlu0 0
        %386 = vperm.xlu0 %385, %v316
        %v387 = vpop.permute.xlu0 %386
        %390 = vset.pattern.permute.xlu0 0
        %391 = vperm.xlu0 %390, %v317
        %v392 = vpop.permute.xlu0 %391
        %395 = vset.pattern.permute.xlu0 0
        %396 = vperm.xlu0 %395, %v318
        %v397 = vpop.permute.xlu0 %396
        %v415 = vunpack.c.l.b16 %v287
        %v416 = vunpack.c.l.b16 %v288
        %v417 = vunpack.c.l.b16 %v289
        %v418 = vunpack.c.l.b16 %v290
        %v419 = vunpack.c.l.b16 %v291
        %v420 = vunpack.c.l.b16 %v292
        %v421 = vunpack.c.l.b16 %v293
        %v422 = vunpack.c.l.b16 %v294
        %v423 = vunpack.c.l.b16 %v295
        %v424 = vunpack.c.l.b16 %v296
        %v425 = vunpack.c.l.b16 %v297
        %v426 = vunpack.c.l.b16 %v298
        %v427 = vunpack.c.l.b16 %v299
        %v428 = vunpack.c.l.b16 %v300
        %v429 = vunpack.c.l.b16 %v301
        %v430 = vunpack.c.l.b16 %v302
        %v431 = vpack.c.b16 %v416, %v415
        %v432 = vpack.c.b16 %v418, %v417
        %v433 = vpack.c.b16 %v420, %v419
        %v434 = vpack.c.b16 %v422, %v421
        %v435 = vpack.c.b16 %v424, %v423
        %v436 = vpack.c.b16 %v426, %v425
        %v437 = vpack.c.b16 %v428, %v427
        %v438 = vpack.c.b16 %v430, %v429
        %vm439 = vcmask 31744
        %v441 = vsel %vm439, %v431, 0
        %v444 = vsel %vm439, %v432, 0
        %v447 = vsel %vm439, %v433, 0
        %v450 = vsel %vm439, %v434, 0
        %v453 = vsel %vm439, %v435, 0
        %v456 = vsel %vm439, %v436, 0
        %v459 = vsel %vm439, %v437, 0
        %v462 = vsel %vm439, %v438, 0
        %vm464 = vcmask 1041408
        %v466 = vsel %vm464, %v285, 0
        %v469 = vsel %vm464, %v286, 0
        %471 = vmatprep.subr.bf16.mxu0 0
        %472 = vmatpush1.bf16.msra.mxu0 0
        %473 = vmatprep.subr.bf16.mxu0 0
        %474 = vmatpush1.bf16.msra.mxu0 0
        %475 = vmatprep.subr.bf16.mxu0 0
        %476 = vmatpush1.bf16.msra.mxu0 0
        %477 = vmatprep.subr.bf16.mxu0 0
        %478 = vmatpush1.bf16.msra.mxu0 0
        %479 = vmatprep.subr.bf16.mxu0 0
        %480 = vmatpush1.bf16.msra.mxu0 0
        %481 = vmatprep.subr.bf16.mxu0 0
        %482 = vmatpush1.bf16.msra.mxu0 0
        %483 = vmatprep.subr.bf16.mxu0 0
        %484 = vmatpush1.bf16.msra.mxu0 0
        %485 = vmatprep.subr.bf16.mxu0 %v469
        %486 = vmatpush1.bf16.msra.mxu0 %v466
        %487 = vmatprep.subr.bf16.mxu0 0
        %488 = vmatpush2.bf16.msra.mxu0 0
        %489 = vmatprep.subr.bf16.mxu0 0
        %490 = vmatpush2.bf16.msra.mxu0 0
        %491 = vmatprep.subr.bf16.mxu0 0
        %492 = vmatpush2.bf16.msra.mxu0 0
        %493 = vmatprep.subr.bf16.mxu0 0
        %494 = vmatpush2.bf16.msra.mxu0 0
        %495 = vmatprep.subr.bf16.mxu0 0
        %496 = vmatpush2.bf16.msra.mxu0 0
        %497 = vmatprep.subr.bf16.mxu0 0
        %498 = vmatpush2.bf16.msra.mxu0 0
        %499 = vmatprep.subr.bf16.mxu0 0
        %500 = vmatpush2.bf16.msra.mxu0 0
        %501 = vmatprep.subr.bf16.mxu0 0
        %502 = vmatpush2.bf16.msra.mxu0 0
        %503 = vmatprep.mubr.bf16.mxu0 0
        %504 = vmatmul.mubr.bf16.gmra.mxu0 %v441
        %v505 = vpop.f32.mrf.mxu0
        %v506 = vadd.f32 %v322, %v505
        %v507 = vpop.f32.mrf.mxu0
        %v508 = vadd.f32 %v322, %v507
        %v509 = vpop.f32.mrf.mxu0
        %v510 = vadd.f32 %v327, %v509
        %v511 = vpop.f32.mrf.mxu0
        %v512 = vadd.f32 %v327, %v511
        %513 = vmatprep.mubr.bf16.mxu0 0
        %514 = vmatmul.mubr.bf16.gmra.mxu0 %v444
        %v515 = vpop.f32.mrf.mxu0
        %v516 = vadd.f32 %v332, %v515
        %v517 = vpop.f32.mrf.mxu0
        %v518 = vadd.f32 %v332, %v517
        %v519 = vpop.f32.mrf.mxu0
        %v520 = vadd.f32 %v337, %v519
        %v521 = vpop.f32.mrf.mxu0
        %v522 = vadd.f32 %v337, %v521
        %523 = vmatprep.mubr.bf16.mxu0 0
        %524 = vmatmul.mubr.bf16.gmra.mxu0 %v447
        %v525 = vpop.f32.mrf.mxu0
        %v526 = vadd.f32 %v342, %v525
        %v527 = vpop.f32.mrf.mxu0
        %v528 = vadd.f32 %v342, %v527
        %v529 = vpop.f32.mrf.mxu0
        %v530 = vadd.f32 %v347, %v529
        %v531 = vpop.f32.mrf.mxu0
        %v532 = vadd.f32 %v347, %v531
        %533 = vmatprep.mubr.bf16.mxu0 0
        %534 = vmatmul.mubr.bf16.gmra.mxu0 %v450
        %v535 = vpop.f32.mrf.mxu0
        %v536 = vadd.f32 %v352, %v535
        %v537 = vpop.f32.mrf.mxu0
        %v538 = vadd.f32 %v352, %v537
        %v539 = vpop.f32.mrf.mxu0
        %v540 = vadd.f32 %v357, %v539
        %v541 = vpop.f32.mrf.mxu0
        %v542 = vadd.f32 %v357, %v541
        %543 = vmatprep.mubr.bf16.mxu0 0
        %544 = vmatmul.mubr.bf16.gmra.mxu0 %v453
        %v545 = vpop.f32.mrf.mxu0
        %v546 = vadd.f32 %v362, %v545
        %v547 = vpop.f32.mrf.mxu0
        %v548 = vadd.f32 %v362, %v547
        %v549 = vpop.f32.mrf.mxu0
        %v550 = vadd.f32 %v367, %v549
        %v551 = vpop.f32.mrf.mxu0
        %v552 = vadd.f32 %v367, %v551
        %553 = vmatprep.mubr.bf16.mxu0 0
        %554 = vmatmul.mubr.bf16.gmra.mxu0 %v456
        %v555 = vpop.f32.mrf.mxu0
        %v556 = vadd.f32 %v372, %v555
        %v557 = vpop.f32.mrf.mxu0
        %v558 = vadd.f32 %v372, %v557
        %v559 = vpop.f32.mrf.mxu0
        %v560 = vadd.f32 %v377, %v559
        %v561 = vpop.f32.mrf.mxu0
        %v562 = vadd.f32 %v377, %v561
        %563 = vmatprep.mubr.bf16.mxu0 0
        %564 = vmatmul.mubr.bf16.gmra.mxu0 %v459
        %v565 = vpop.f32.mrf.mxu0
        %v566 = vadd.f32 %v382, %v565
        %v567 = vpop.f32.mrf.mxu0
        %v568 = vadd.f32 %v382, %v567
        %v569 = vpop.f32.mrf.mxu0
        %v570 = vadd.f32 %v387, %v569
        %v571 = vpop.f32.mrf.mxu0
        %v572 = vadd.f32 %v387, %v571
        %573 = vmatprep.mubr.bf16.mxu0 0
        %574 = vmatmul.mubr.bf16.gmra.mxu0 %v462
        %v575 = vpop.f32.mrf.mxu0
        %v576 = vadd.f32 %v392, %v575
        %v577 = vpop.f32.mrf.mxu0
        %v578 = vadd.f32 %v392, %v577
        %v579 = vpop.f32.mrf.mxu0
        %v580 = vadd.f32 %v397, %v579
        %v581 = vpop.f32.mrf.mxu0
        %v582 = vadd.f32 %v397, %v581
        %583 = vdwg.mxu0
        %v584 = vmax.f32 %v506, 0.0
        %v585 = vmax.f32 %v508, 0.0
        %v586 = vmax.f32 %v510, 0.0
        %v587 = vmax.f32 %v512, 0.0
        %v588 = vmax.f32 %v516, 0.0
        %v589 = vmax.f32 %v518, 0.0
        %v590 = vmax.f32 %v520, 0.0
        %v591 = vmax.f32 %v522, 0.0
        %v592 = vmax.f32 %v526, 0.0
        %v593 = vmax.f32 %v528, 0.0
        %v594 = vmax.f32 %v530, 0.0
        %v595 = vmax.f32 %v532, 0.0
        %v596 = vmax.f32 %v536, 0.0
        %v597 = vmax.f32 %v538, 0.0
        %v598 = vmax.f32 %v540, 0.0
        %v599 = vmax.f32 %v542, 0.0
        %v600 = vmax.f32 %v546, 0.0
        %v601 = vmax.f32 %v548, 0.0
        %v602 = vmax.f32 %v550, 0.0
        %v603 = vmax.f32 %v552, 0.0
        %v604 = vmax.f32 %v556, 0.0
        %v605 = vmax.f32 %v558, 0.0
        %v606 = vmax.f32 %v560, 0.0
        %v607 = vmax.f32 %v562, 0.0
        %v608 = vmax.f32 %v566, 0.0
        %v609 = vmax.f32 %v568, 0.0
        %v610 = vmax.f32 %v570, 0.0
        %v611 = vmax.f32 %v572, 0.0
        %v612 = vmax.f32 %v576, 0.0
        %v613 = vmax.f32 %v578, 0.0
        %v614 = vmax.f32 %v580, 0.0
        %v615 = vmax.f32 %v582, 0.0
        %v616 = vld [vmem:[%s3] sm:$0xf]
        %v617 = vld [vmem:[%s3 + $0x4] sm:$0xf]
        %v618 = vpack.c.bf16 %v586, %v584
        %v619 = vpack.c.bf16 %v587, %v585
        %v620 = vpack.c.bf16 %v590, %v588
        %v621 = vpack.c.bf16 %v591, %v589
        %v622 = vpack.c.bf16 %v594, %v592
        %v623 = vpack.c.bf16 %v595, %v593
        %v624 = vpack.c.bf16 %v598, %v596
        %v625 = vpack.c.bf16 %v599, %v597
        %v626 = vpack.c.bf16 %v602, %v600
        %v627 = vpack.c.bf16 %v603, %v601
        %v628 = vpack.c.bf16 %v606, %v604
        %v629 = vpack.c.bf16 %v607, %v605
        %v630 = vpack.c.bf16 %v610, %v608
        %v631 = vpack.c.bf16 %v611, %v609
        %v632 = vpack.c.bf16 %v614, %v612
        %v633 = vpack.c.bf16 %v615, %v613
        %v634 = vld [vmem:[%s4] sm:$0xff]
        %v635 = vld [vmem:[%s4 + $0x8] sm:$0xff]
        %637 = vset.pattern.permute.xlu0 0
        %638 = vperm.xlu0 %637, %v634
        %v639 = vpop.permute.xlu0 %638
        %642 = vset.pattern.permute.xlu0 0
        %643 = vperm.xlu0 %642, %v635
        %v644 = vpop.permute.xlu0 %643
        %v648 = vunpack.c.l.b16 %v616
        %v649 = vunpack.c.l.b16 %v617
        %v650 = vpack.c.b16 %v649, %v648
        %652 = vmatprep.subr.bf16.mxu0 %v633
        %653 = vmatpush1.bf16.msra.mxu0 %v632
        %654 = vmatprep.subr.bf16.mxu0 %v631
        %655 = vmatpush1.bf16.msra.mxu0 %v630
        %656 = vmatprep.subr.bf16.mxu0 %v629
        %657 = vmatpush1.bf16.msra.mxu0 %v628
        %658 = vmatprep.subr.bf16.mxu0 %v627
        %659 = vmatpush1.bf16.msra.mxu0 %v626
        %660 = vmatprep.subr.bf16.mxu0 %v625
        %661 = vmatpush1.bf16.msra.mxu0 %v624
        %662 = vmatprep.subr.bf16.mxu0 %v623
        %663 = vmatpush1.bf16.msra.mxu0 %v622
        %664 = vmatprep.subr.bf16.mxu0 %v621
        %665 = vmatpush1.bf16.msra.mxu0 %v620
        %666 = vmatprep.subr.bf16.mxu0 %v619
        %667 = vmatpush1.bf16.msra.mxu0 %v618
        %668 = vmatprep.subr.bf16.mxu0 0
        %669 = vmatpush2.bf16.msra.mxu0 0
        %670 = vmatprep.subr.bf16.mxu0 0
        %671 = vmatpush2.bf16.msra.mxu0 0
        %672 = vmatprep.subr.bf16.mxu0 0
        %673 = vmatpush2.bf16.msra.mxu0 0
        %674 = vmatprep.subr.bf16.mxu0 0
        %675 = vmatpush2.bf16.msra.mxu0 0
        %676 = vmatprep.subr.bf16.mxu0 0
        %677 = vmatpush2.bf16.msra.mxu0 0
        %678 = vmatprep.subr.bf16.mxu0 0
        %679 = vmatpush2.bf16.msra.mxu0 0
        %680 = vmatprep.subr.bf16.mxu0 0
        %681 = vmatpush2.bf16.msra.mxu0 0
        %682 = vmatprep.subr.bf16.mxu0 0
        %683 = vmatpush2.bf16.msra.mxu0 0
        %684 = vmatprep.mubr.bf16.mxu0 0
        %685 = vmatmul.mubr.bf16.gmra.mxu0 %v650
        %v686 = vpop.f32.mrf.mxu0
        %v687 = vadd.f32 %v639, %v686
        %v688 = vpop.f32.mrf.mxu0
        %v689 = vadd.f32 %v639, %v688
        %v690 = vpop.f32.mrf.mxu0
        %v691 = vadd.f32 %v644, %v690
        %v692 = vpop.f32.mrf.mxu0
        %v693 = vadd.f32 %v644, %v692
        %694 = vdwg.mxu0
        %v695 = vmax.f32 %v687, 0.0
        %v696 = vmax.f32 %v689, 0.0
        %v697 = vmax.f32 %v691, 0.0
        %v698 = vmax.f32 %v693, 0.0
        %v699 = vld [vmem:[%s5] sm:$0x3]
        %v700 = vpack.c.bf16 %v697, %v695
        %v701 = vpack.c.bf16 %v698, %v696
        %v702 = vld [vmem:[%s6] sm:$0x7]
        %704 = vset.pattern.permute.xlu0 0
        %705 = vperm.xlu0 %704, %v702
        %v706 = vpop.permute.xlu0 %705
        %vm708 = vcmask 130048
        %v710 = vsel %vm708, %v699, 0
        %712 = vmatprep.subr.bf16.mxu0 0
        %713 = vmatpush1.bf16.msra.mxu0 0
        %714 = vmatprep.subr.bf16.mxu0 0
        %715 = vmatpush1.bf16.msra.mxu0 0
        %716 = vmatprep.subr.bf16.mxu0 0
        %717 = vmatpush1.bf16.msra.mxu0 0
        %718 = vmatprep.subr.bf16.mxu0 0
        %719 = vmatpush1.bf16.msra.mxu0 0
        %720 = vmatprep.subr.bf16.mxu0 0
        %721 = vmatpush1.bf16.msra.mxu0 0
        %722 = vmatprep.subr.bf16.mxu0 0
        %723 = vmatpush1.bf16.msra.mxu0 0
        %724 = vmatprep.subr.bf16.mxu0 0
        %725 = vmatpush1.bf16.msra.mxu0 0
        %726 = vmatprep.subr.bf16.mxu0 %v701
        %727 = vmatpush1.bf16.msra.mxu0 %v700
        %728 = vmatprep.subr.bf16.mxu0 0
        %729 = vmatpush2.bf16.msra.mxu0 0
        %730 = vmatprep.subr.bf16.mxu0 0
        %731 = vmatpush2.bf16.msra.mxu0 0
        %732 = vmatprep.subr.bf16.mxu0 0
        %733 = vmatpush2.bf16.msra.mxu0 0
        %734 = vmatprep.subr.bf16.mxu0 0
        %735 = vmatpush2.bf16.msra.mxu0 0
        %736 = vmatprep.subr.bf16.mxu0 0
        %737 = vmatpush2.bf16.msra.mxu0 0
        %738 = vmatprep.subr.bf16.mxu0 0
        %739 = vmatpush2.bf16.msra.mxu0 0
        %740 = vmatprep.subr.bf16.mxu0 0
        %741 = vmatpush2.bf16.msra.mxu0 0
        %742 = vmatprep.subr.bf16.mxu0 0
        %743 = vmatpush2.bf16.msra.mxu0 0
        %744 = vmatprep.mubr.bf16.mxu0 0
        %745 = vmatmul.mubr.bf16.gmra.mxu0 %v710
        %v746 = vpop.f32.mrf.mxu0
        %v747 = vadd.f32 %v706, %v746
        %v748 = vpop.f32.mrf.mxu0
        %v749 = vadd.f32 %v706, %v748
        %v750 = vpop.f32.mrf.mxu0
        %v751 = vpop.f32.mrf.mxu0
        %752 = vdwg.mxu0
        %v755 = vcombine.low %v747, %v749
        %757 = vst [vmem:[%s272] sm:$0x77] %v755
        %s758 = sand.u32 %s181, 1
        %s759 = scalar_lea.sflag [#allocation3], %s758
        %s760 = sand.u32 %s181, 1
        %s761 = smul.addr %s760, 8
        %s762 = scalar_lea.vmem [#allocation2], %s761
        // Predicated region
        $region49: #{net_forward.1} parent=47 // pred_check
          %p763 = pneg %p191
        $region50: #{net_forward.1} parent=47 // pred_check_branch
          %765 = sbr.rel (%p763) target = $region52
        $region51: #{net_forward.1} parent=47 // pred_region
          %s766 = smul.u32 2, %s21
          %s768 = ssub.s32 128, 128
          %769 = vsyncadd %s759, %s768
          %s770 = smul.addr %s766, 64
          %s771 = scalar_lea.hbm %s7, %s770
          %s773 = sshll.u32 %s762, 4
          %s774 = int_to_ptr.vmem [resolvable:$true] %s773
          %776 = dma.vmem_to_hbm [thread:$0]  %s774, 128, %s771, %s759
        $region52: #{net_forward.1} parent=47 // pred_fallthru
          _
      $region48: #{net_forward.1} parent=5 // pred_fallthru
        _
      %p777 = scmp.le.s32.totalorder 2, %s16
      // Predicated region
      $region53: #{net_forward.1} parent=5 // pred_check
        %p778 = pneg %p777
      $region54: #{net_forward.1} parent=5 // pred_check_branch
        %780 = sbr.rel (%p778) target = $region56
      $region55: #{net_forward.1} parent=5 // pred_region
        %s781 = ssub.s32 %s16, 2
        // Predicated region
        $region57: #{net_forward.1} parent=55 // pred_check
          %p782 = pneg %p197
        $region58: #{net_forward.1} parent=55 // pred_check_branch
          %784 = sbr.rel (%p782) target = $region60
        $region59: #{net_forward.1} parent=55 // pred_region
          %s785 = sand.u32 %s182, 1
          %s786 = scalar_lea.sflag [#allocation3], %s785
          %s787 = sand.u32 %s182, 1
          %s788 = smul.addr %s787, 8
          %s789 = scalar_lea.vmem [#allocation2], %s788
          %790 = dma.done %s786, 128
        $region60: #{net_forward.1} parent=55 // pred_fallthru
          _
      $region56: #{net_forward.1} parent=5 // pred_fallthru
        _
    $region6: #{net_forward.1} parent=1 // loop_footer
      %s20 = sadd.s32 1, %s16
    $region7: #{net_forward.1} parent=1 // loop_footer_branch
      %15 = sbr.rel target = $region3
    $region8: #{net_forward.1} parent=1 // loop_exit
      _
    %791 = vsyncpa [#allocation3], 1
    %s792 = scalar_lea.sflag [#allocation3], 1
    %793 = vsyncpa %s792, 1

</llo_original>
